<compile_context>
chip_gen: v7x
topology: tpu7x:2x2x1
jax: 0.10.0
libtpu: 0.0.40
codegen_flags: <defaults>
</compile_context>

<pallas_src>
import jax
import jax.numpy as jnp
from jax.experimental import pallas as pl
from jax.experimental.pallas import tpu as pltpu


def _make_fam_kernel(N, C, H, W):
    """Builds the fused FAM kernel for fixed (N, C, H, W)."""
    NC, HW = N * C, H * W
    taps = [(dh, dw) for dh in (-1, 0, 1) for dw in (-1, 0, 1)]  # t = kh*3+kw

    def kernel(x1_ref, x2_ref, w_ref, b_ref, o_ref):
        # x1_ref/x2_ref/o_ref: (N*C, HW)   lane dim = HW (lane dense)
        # w_ref: (9*N*C, N*C)  tap-major block-diagonal conv weights
        # b_ref: (N*C, 1)      bias tiled per image
        x1 = x1_ref[...].astype(jnp.float32)
        x2 = x2_ref[...].astype(jnp.float32)
        x = x1 * x2                                   # FAM: x = x1 * x2

        # Zero-padding validity predicates from a lane iota (shared by all
        # taps; no mask tensor input, no per-tap sublane broadcast).
        lane = jax.lax.broadcasted_iota(jnp.int32, (NC, HW), 1).astype(jnp.float32)
        col = lane - jnp.floor(lane / W) * W          # w coordinate of each lane
        h_lo = lane >= W                              # h >= 1      (for dh = -1)
        h_hi = lane < (H - 1) * W                     # h <= H - 2  (for dh = +1)
        w_lo = col >= 1                               # w >= 1      (for dw = -1)
        w_hi = col <= W - 2                           # w <= W - 2  (for dw = +1)

        # conv3x3 (zero padding=1) + bias: 9 tiny block-diag MXU matmuls
        # accumulated in registers; no im2col scratch.
        acc = b_ref[...]                              # (NC, 1), lane-broadcasts
        for t, (dh, dw) in enumerate(taps):
            s = dh * W + dw                           # flat lane shift
            # slab[r, p] = x[r, p + s]  (wrapped lanes are masked to 0 below)
            slab = x if s == 0 else pltpu.roll(x, shift=(-s) % HW, axis=1)
            cond = None
            if dh == -1:
                cond = h_lo
            elif dh == 1:
                cond = h_hi
            if dw == -1:
                cond = w_lo if cond is None else cond & w_lo
            elif dw == 1:
                cond = w_hi if cond is None else cond & w_hi
            if cond is not None:
                slab = jnp.where(cond, slab, 0.0)
            w_t = w_ref[pl.ds(t * NC, NC), :]         # (NC, NC) block-diag tap
            acc = acc + jnp.dot(w_t, slab, preferred_element_type=jnp.float32)

        # ELU (alpha=1, torch default), overflow-safe formulation.
        feat = jnp.where(acc > 0, acc, jnp.exp(jnp.minimum(acc, 0.0)) - 1.0)

        # FAM residual: out = x1 + ELU(conv(x1 * x2) + b)
        o_ref[...] = (x1 + feat).astype(o_ref.dtype)

    return kernel


@jax.jit
def fam_forward(x1, x2, weight, bias):
    """FAM forward: x1 + ELU(conv3x3_pad1(x1 * x2) + bias).

    x1, x2:  (N, C, H, W)  NCHW, float32
    weight:  (C, C, 3, 3)  PyTorch Conv2d OIHW layout
    bias:    (C,)
    returns: (N, C, H, W)
    """
    N, C, H, W = x1.shape
    Cout, Cin, KH, KW = weight.shape
    NC, HW = N * C, H * W

    # Layout-preserving (free) reshapes: (N, C, H, W) -> (N*C, H*W).
    x1f = x1.reshape(NC, HW)
    x2f = x2.reshape(NC, HW)

    # Per-tap block-diagonal weights so ONE (NC, NC) @ (NC, HW) matmul per tap
    # handles the whole batch:
    #   w_big[t*NC + n*C + co, m*C + ci] = weight[co, ci, kh, kw] * (n == m)
    eye_n = jnp.eye(N, dtype=jnp.float32)
    w_big = jnp.concatenate(
        [jnp.kron(eye_n, weight[:, :, kh, kw].astype(jnp.float32))
         for kh in range(KH) for kw in range(KW)], axis=0)        # (9*NC, NC)
    b_big = jnp.tile(bias.astype(jnp.float32), N).reshape(NC, 1)  # (NC, 1)

    kernel = _make_fam_kernel(N, C, H, W)
    out = pl.pallas_call(
        kernel,
        out_shape=jax.ShapeDtypeStruct((NC, HW), x1.dtype),
        in_specs=[
            pl.BlockSpec((NC, HW), lambda: (0, 0)),               # x1
            pl.BlockSpec((NC, HW), lambda: (0, 0)),               # x2
            pl.BlockSpec((KH * KW * NC, NC), lambda: (0, 0)),     # conv weights
            pl.BlockSpec((NC, 1), lambda: (0, 0)),                # bias
        ],
        out_specs=pl.BlockSpec((NC, HW), lambda: (0, 0)),
    )(x1f, x2f, w_big, b_big)

    return out.reshape(N, Cout, H, W)


def fam_reference(x1, x2, weight, bias):
    """Pure-JAX reference with the same semantics as FAM.forward."""
    x = x1 * x2
    y = jax.lax.conv_general_dilated(
        x, weight, window_strides=(1, 1), padding=((1, 1), (1, 1)),
        dimension_numbers=("NCHW", "OIHW", "NCHW"))
    y = y + bias[None, :, None, None]
    return x1 + jax.nn.elu(y)


if __name__ == "__main__":
    key = jax.random.PRNGKey(0)
    k1, k2, kw, kb = jax.random.split(key, 4)

    N, C, H, W = 2, 4, 16, 16          # FAM(channel=4), 16x16 feature maps
    x1 = jax.random.normal(k1, (N, C, H, W), dtype=jnp.float32)
    x2 = jax.random.normal(k2, (N, C, H, W), dtype=jnp.float32)
    weight = 0.1 * jax.random.normal(kw, (C, C, 3, 3), dtype=jnp.float32)
    bias = 0.1 * jax.random.normal(kb, (C,), dtype=jnp.float32)

    out = jax.block_until_ready(fam_forward(x1, x2, weight, bias))
    ref = jax.block_until_ready(fam_reference(x1, x2, weight, bias))

    assert out.shape == (N, C, H, W)
    assert jnp.allclose(out, ref, atol=1e-4, rtol=1e-4), "mismatch vs reference"

    print("KERNEL_OK")
</pallas_src>

<mosaic_0001>
module attributes {stable_mosaic.version = 11 : i64} {
  func.func @kernel(%arg0: memref<8x256xf32, #tpu.memory_space<vmem>>, %arg1: memref<8x256xf32, #tpu.memory_space<vmem>>, %arg2: memref<72x8xf32, #tpu.memory_space<vmem>>, %arg3: memref<8x1xf32, #tpu.memory_space<vmem>>, %arg4: memref<8x256xf32, #tpu.memory_space<vmem>>) attributes {dimension_semantics = [], scalar_prefetch = 0 : i64, scratch_operands = 0 : i64, tpu.core_type = #tpu.core_type<tc>} {
    %c0 = arith.constant 0 : index
    %c0_0 = arith.constant 0 : index
    %0 = vector.load %arg0[%c0, %c0_0] : memref<8x256xf32, #tpu.memory_space<vmem>>, vector<8x256xf32>
    %c0_1 = arith.constant 0 : index
    %c0_2 = arith.constant 0 : index
    %1 = vector.load %arg1[%c0_1, %c0_2] : memref<8x256xf32, #tpu.memory_space<vmem>>, vector<8x256xf32>
    %2 = arith.mulf %0, %1 : vector<8x256xf32>
    %3 = tpu.iota {dimensions = array<i32: 1>} : vector<8x256xi32>
    %4 = arith.sitofp %3 : vector<8x256xi32> to vector<8x256xf32>
    %cst = arith.constant 1.600000e+01 : f32
    %5 = vector.broadcast %cst : f32 to vector<8x256xf32>
    %6 = arith.divf %4, %5 : vector<8x256xf32>
    %7 = math.floor %6 : vector<8x256xf32>
    %cst_3 = arith.constant 1.600000e+01 : f32
    %8 = vector.broadcast %cst_3 : f32 to vector<8x256xf32>
    %9 = arith.mulf %7, %8 : vector<8x256xf32>
    %10 = arith.subf %4, %9 : vector<8x256xf32>
    %cst_4 = arith.constant 1.600000e+01 : f32
    %11 = vector.broadcast %cst_4 : f32 to vector<8x256xf32>
    %12 = arith.cmpf oge, %4, %11 : vector<8x256xf32>
    %cst_5 = arith.constant 2.400000e+02 : f32
    %13 = vector.broadcast %cst_5 : f32 to vector<8x256xf32>
    %14 = arith.cmpf olt, %4, %13 : vector<8x256xf32>
    %cst_6 = arith.constant 1.000000e+00 : f32
    %15 = vector.broadcast %cst_6 : f32 to vector<8x256xf32>
    %16 = arith.cmpf oge, %10, %15 : vector<8x256xf32>
    %cst_7 = arith.constant 1.400000e+01 : f32
    %17 = vector.broadcast %cst_7 : f32 to vector<8x256xf32>
    %18 = arith.cmpf ole, %10, %17 : vector<8x256xf32>
    %c0_8 = arith.constant 0 : index
    %c0_9 = arith.constant 0 : index
    %19 = vector.load %arg3[%c0_8, %c0_9] : memref<8x1xf32, #tpu.memory_space<vmem>>, vector<8x1xf32>
    %c17_i32 = arith.constant 17 : i32
    %20 = tpu.dynamic_rotate %2 by %c17_i32 dim 1 : vector<8x256xf32>, i32 -> vector<8x256xf32>
    %21 = arith.andi %12, %16 : vector<8x256xi1>
    %cst_10 = arith.constant 0.000000e+00 : f32
    %22 = vector.broadcast %cst_10 : f32 to vector<8x256xf32>
    %23 = arith.select %21, %20, %22 : vector<8x256xi1>, vector<8x256xf32>
    %c0_11 = arith.constant 0 : index
    %c0_12 = arith.constant 0 : index
    %24 = vector.load %arg2[%c0_11, %c0_12] : memref<72x8xf32, #tpu.memory_space<vmem>>, vector<8x8xf32>
    %cst_13 = arith.constant dense<0.000000e+00> : vector<8x256xf32>
    %25 = tpu.matmul %24, %23, %cst_13 {dimension_numbers = #tpu.dot_dimension_numbers<[1], [0], [0], [1], [0, 0, 1, 1], [], []>} : vector<8x8xf32>, vector<8x256xf32>, vector<8x256xf32> -> vector<8x256xf32>
    %26 = vector.broadcast %19 : vector<8x1xf32> to vector<8x256xf32>
    %27 = arith.addf %26, %25 : vector<8x256xf32>
    %c16_i32 = arith.constant 16 : i32
    %28 = tpu.dynamic_rotate %2 by %c16_i32 dim 1 : vector<8x256xf32>, i32 -> vector<8x256xf32>
    %cst_14 = arith.constant 0.000000e+00 : f32
    %29 = vector.broadcast %cst_14 : f32 to vector<8x256xf32>
    %30 = arith.select %12, %28, %29 : vector<8x256xi1>, vector<8x256xf32>
    %c8 = arith.constant 8 : index
    %c0_15 = arith.constant 0 : index
    %31 = vector.load %arg2[%c8, %c0_15] : memref<72x8xf32, #tpu.memory_space<vmem>>, vector<8x8xf32>
    %cst_16 = arith.constant dense<0.000000e+00> : vector<8x256xf32>
    %32 = tpu.matmul %31, %30, %cst_16 {dimension_numbers = #tpu.dot_dimension_numbers<[1], [0], [0], [1], [0, 0, 1, 1], [], []>} : vector<8x8xf32>, vector<8x256xf32>, vector<8x256xf32> -> vector<8x256xf32>
    %33 = arith.addf %27, %32 : vector<8x256xf32>
    %c15_i32 = arith.constant 15 : i32
    %34 = tpu.dynamic_rotate %2 by %c15_i32 dim 1 : vector<8x256xf32>, i32 -> vector<8x256xf32>
    %35 = arith.andi %12, %18 : vector<8x256xi1>
    %cst_17 = arith.constant 0.000000e+00 : f32
    %36 = vector.broadcast %cst_17 : f32 to vector<8x256xf32>
    %37 = arith.select %35, %34, %36 : vector<8x256xi1>, vector<8x256xf32>
    %c16 = arith.constant 16 : index
    %c0_18 = arith.constant 0 : index
    %38 = vector.load %arg2[%c16, %c0_18] : memref<72x8xf32, #tpu.memory_space<vmem>>, vector<8x8xf32>
    %cst_19 = arith.constant dense<0.000000e+00> : vector<8x256xf32>
    %39 = tpu.matmul %38, %37, %cst_19 {dimension_numbers = #tpu.dot_dimension_numbers<[1], [0], [0], [1], [0, 0, 1, 1], [], []>} : vector<8x8xf32>, vector<8x256xf32>, vector<8x256xf32> -> vector<8x256xf32>
    %40 = arith.addf %33, %39 : vector<8x256xf32>
    %c1_i32 = arith.constant 1 : i32
    %41 = tpu.dynamic_rotate %2 by %c1_i32 dim 1 : vector<8x256xf32>, i32 -> vector<8x256xf32>
    %cst_20 = arith.constant 0.000000e+00 : f32
    %42 = vector.broadcast %cst_20 : f32 to vector<8x256xf32>
    %43 = arith.select %16, %41, %42 : vector<8x256xi1>, vector<8x256xf32>
    %c24 = arith.constant 24 : index
    %c0_21 = arith.constant 0 : index
    %44 = vector.load %arg2[%c24, %c0_21] : memref<72x8xf32, #tpu.memory_space<vmem>>, vector<8x8xf32>
    %cst_22 = arith.constant dense<0.000000e+00> : vector<8x256xf32>
    %45 = tpu.matmul %44, %43, %cst_22 {dimension_numbers = #tpu.dot_dimension_numbers<[1], [0], [0], [1], [0, 0, 1, 1], [], []>} : vector<8x8xf32>, vector<8x256xf32>, vector<8x256xf32> -> vector<8x256xf32>
    %46 = arith.addf %40, %45 : vector<8x256xf32>
    %c32 = arith.constant 32 : index
    %c0_23 = arith.constant 0 : index
    %47 = vector.load %arg2[%c32, %c0_23] : memref<72x8xf32, #tpu.memory_space<vmem>>, vector<8x8xf32>
    %cst_24 = arith.constant dense<0.000000e+00> : vector<8x256xf32>
    %48 = tpu.matmul %47, %2, %cst_24 {dimension_numbers = #tpu.dot_dimension_numbers<[1], [0], [0], [1], [0, 0, 1, 1], [], []>} : vector<8x8xf32>, vector<8x256xf32>, vector<8x256xf32> -> vector<8x256xf32>
    %49 = arith.addf %46, %48 : vector<8x256xf32>
    %c255_i32 = arith.constant 255 : i32
    %50 = tpu.dynamic_rotate %2 by %c255_i32 dim 1 : vector<8x256xf32>, i32 -> vector<8x256xf32>
    %cst_25 = arith.constant 0.000000e+00 : f32
    %51 = vector.broadcast %cst_25 : f32 to vector<8x256xf32>
    %52 = arith.select %18, %50, %51 : vector<8x256xi1>, vector<8x256xf32>
    %c40 = arith.constant 40 : index
    %c0_26 = arith.constant 0 : index
    %53 = vector.load %arg2[%c40, %c0_26] : memref<72x8xf32, #tpu.memory_space<vmem>>, vector<8x8xf32>
    %cst_27 = arith.constant dense<0.000000e+00> : vector<8x256xf32>
    %54 = tpu.matmul %53, %52, %cst_27 {dimension_numbers = #tpu.dot_dimension_numbers<[1], [0], [0], [1], [0, 0, 1, 1], [], []>} : vector<8x8xf32>, vector<8x256xf32>, vector<8x256xf32> -> vector<8x256xf32>
    %55 = arith.addf %49, %54 : vector<8x256xf32>
    %c241_i32 = arith.constant 241 : i32
    %56 = tpu.dynamic_rotate %2 by %c241_i32 dim 1 : vector<8x256xf32>, i32 -> vector<8x256xf32>
    %57 = arith.andi %14, %16 : vector<8x256xi1>
    %cst_28 = arith.constant 0.000000e+00 : f32
    %58 = vector.broadcast %cst_28 : f32 to vector<8x256xf32>
    %59 = arith.select %57, %56, %58 : vector<8x256xi1>, vector<8x256xf32>
    %c48 = arith.constant 48 : index
    %c0_29 = arith.constant 0 : index
    %60 = vector.load %arg2[%c48, %c0_29] : memref<72x8xf32, #tpu.memory_space<vmem>>, vector<8x8xf32>
    %cst_30 = arith.constant dense<0.000000e+00> : vector<8x256xf32>
    %61 = tpu.matmul %60, %59, %cst_30 {dimension_numbers = #tpu.dot_dimension_numbers<[1], [0], [0], [1], [0, 0, 1, 1], [], []>} : vector<8x8xf32>, vector<8x256xf32>, vector<8x256xf32> -> vector<8x256xf32>
    %62 = arith.addf %55, %61 : vector<8x256xf32>
    %c240_i32 = arith.constant 240 : i32
    %63 = tpu.dynamic_rotate %2 by %c240_i32 dim 1 : vector<8x256xf32>, i32 -> vector<8x256xf32>
    %cst_31 = arith.constant 0.000000e+00 : f32
    %64 = vector.broadcast %cst_31 : f32 to vector<8x256xf32>
    %65 = arith.select %14, %63, %64 : vector<8x256xi1>, vector<8x256xf32>
    %c56 = arith.constant 56 : index
    %c0_32 = arith.constant 0 : index
    %66 = vector.load %arg2[%c56, %c0_32] : memref<72x8xf32, #tpu.memory_space<vmem>>, vector<8x8xf32>
    %cst_33 = arith.constant dense<0.000000e+00> : vector<8x256xf32>
    %67 = tpu.matmul %66, %65, %cst_33 {dimension_numbers = #tpu.dot_dimension_numbers<[1], [0], [0], [1], [0, 0, 1, 1], [], []>} : vector<8x8xf32>, vector<8x256xf32>, vector<8x256xf32> -> vector<8x256xf32>
    %68 = arith.addf %62, %67 : vector<8x256xf32>
    %c239_i32 = arith.constant 239 : i32
    %69 = tpu.dynamic_rotate %2 by %c239_i32 dim 1 : vector<8x256xf32>, i32 -> vector<8x256xf32>
    %70 = arith.andi %14, %18 : vector<8x256xi1>
    %cst_34 = arith.constant 0.000000e+00 : f32
    %71 = vector.broadcast %cst_34 : f32 to vector<8x256xf32>
    %72 = arith.select %70, %69, %71 : vector<8x256xi1>, vector<8x256xf32>
    %c64 = arith.constant 64 : index
    %c0_35 = arith.constant 0 : index
    %73 = vector.load %arg2[%c64, %c0_35] : memref<72x8xf32, #tpu.memory_space<vmem>>, vector<8x8xf32>
    %cst_36 = arith.constant dense<0.000000e+00> : vector<8x256xf32>
    %74 = tpu.matmul %73, %72, %cst_36 {dimension_numbers = #tpu.dot_dimension_numbers<[1], [0], [0], [1], [0, 0, 1, 1], [], []>} : vector<8x8xf32>, vector<8x256xf32>, vector<8x256xf32> -> vector<8x256xf32>
    %75 = arith.addf %68, %74 : vector<8x256xf32>
    %cst_37 = arith.constant 0.000000e+00 : f32
    %76 = vector.broadcast %cst_37 : f32 to vector<8x256xf32>
    %77 = arith.cmpf ogt, %75, %76 : vector<8x256xf32>
    %cst_38 = arith.constant 0.000000e+00 : f32
    %78 = vector.broadcast %cst_38 : f32 to vector<8x256xf32>
    %79 = arith.minimumf %75, %78 : vector<8x256xf32>
    %80 = math.exp %79 : vector<8x256xf32>
    %cst_39 = arith.constant 1.000000e+00 : f32
    %81 = vector.broadcast %cst_39 : f32 to vector<8x256xf32>
    %82 = arith.subf %80, %81 : vector<8x256xf32>
    %83 = arith.select %77, %75, %82 : vector<8x256xi1>, vector<8x256xf32>
    %84 = arith.addf %0, %83 : vector<8x256xf32>
    %c0_40 = arith.constant 0 : index
    %c0_41 = arith.constant 0 : index
    %85 = vector.load %arg4[%c0_40, %c0_41] : memref<8x256xf32, #tpu.memory_space<vmem>>, vector<8x256xf32>
    tpu.vector_store %arg4[%c0_40, %c0_41], %84 {strides = array<i32>} : memref<8x256xf32, #tpu.memory_space<vmem>>, vector<8x256xf32>,
    return
  }
}

</mosaic_0001>

<llo_original>
// kernel: tile.8
$region0: #{tile.8}
  #allocation0 [shape = 's32[1]{0}', space=sflag, size = 0x4, scoped, tag = 'scoped memory for tile.8']
  %s0 = inlined_call_operand.vmem [shape: f32[4], index: 0, kind: input, shape index: {}]
  %s1 = inlined_call_operand.vmem [shape: f32[2,4], index: 1, kind: output, shape index: {}]
  // Predicated region
  $region2: #{tile.8} parent=0 // pred_check
    _
  $region3: #{tile.8} parent=0 // pred_check_branch
    %3 = sbr.rel (0) target = $region5
  $region4: #{tile.8} parent=0 // pred_region
    _
  $region5: #{tile.8} parent=0 // pred_fallthru
    _
  %v4 = vld [vmem:[%s0] ss:$0 sm:$0xff]
  %5 = vst [vmem:[%s1] sm:$0x3] %v4

// kernel: tile.0
$region0: #{tile.0}
  %s0 = inlined_call_operand.vmem [shape: f32[2,4], index: 0, kind: input, shape index: {}]
  %s1 = inlined_call_operand.vmem [shape: f32[8,1], index: 1, kind: output, shape index: {}]
  $region1: #{tile.0} parent=0
    #allocation0 [shape = 'u8[4096]{0}', space=vmem, size = 0x1000, scoped, tag = 'scoped mem for input reshape']
    %s3 = sshllo.u32 0, 2
    %v4 = vld [vmem:[%s0] sm:%s3]
    %5 = vst [vmem:[#allocation0] sm:%s3] %v4
    %v6 = vld [vmem:[#allocation0] sm:$0x3]
    %vm7 = vcmask 7168
    %8 = vst.msk [vmem:[%s1] ss:$4 sm:$0x3] %vm7, %v6
    %v9 = vld [vmem:[#allocation0] sm:$0x3]
    %10 = vrot.lane.b32.xlu0 %v9, 127
    %v11 = vpop.permute.xlu0 %10
    %vm12 = vcmask 7168
    %s13 = scalar_lea.vmem %s1, 1
    %14 = vst.msk [vmem:[%s13] ss:$4 sm:$0x3] %vm12, %v11
    %v15 = vld [vmem:[#allocation0] sm:$0x3]
    %16 = vrot.lane.b32.xlu0 %v15, 126
    %v17 = vpop.permute.xlu0 %16
    %vm18 = vcmask 7168
    %s19 = scalar_lea.vmem %s1, 2
    %20 = vst.msk [vmem:[%s19] ss:$4 sm:$0x3] %vm18, %v17
    %v21 = vld [vmem:[#allocation0] sm:$0x3]
    %22 = vrot.lane.b32.xlu0 %v21, 125
    %v23 = vpop.permute.xlu0 %22
    %vm24 = vcmask 7168
    %s25 = scalar_lea.vmem %s1, 3
    %26 = vst.msk [vmem:[%s25] ss:$4 sm:$0x3] %vm24, %v23

// kernel: fam_forward.1
$region0: #{fam_forward.1}
  #allocation0 [shape = 'u32[]', space=smem, size = 0x4, offset = 0x4, fixed_abs, tag = 'smem constant byte address 0x4 - core index']
  #allocation1 [shape = 'u32[144,128]{1,0:T(1,128)}', space=vmem, size = 0x12000, scoped, tag = 'internal scratch']
  %s0 = inlined_call_operand.vmem [shape: f32[8,256], index: 0, kind: input, shape index: {}]
  %s1 = inlined_call_operand.vmem [shape: f32[8,256], index: 1, kind: input, shape index: {}]
  %s2 = inlined_call_operand.vmem [shape: f32[72,8], index: 2, kind: input, shape index: {}]
  %s3 = inlined_call_operand.vmem [shape: f32[8,1], index: 3, kind: input, shape index: {}]
  %s4 = inlined_call_operand.vmem [shape: f32[8,256], index: 4, kind: output, shape index: {}]
  %s5 = sld [smem:[#allocation0]]
  $region26: #{fam_forward.1} parent=0
    _
  %s7 = ssub.s32 1, %s5
  %s8 = scalar_select 0, %s7, %s5
  // Predicated region
  $region2: #{fam_forward.1} parent=0 // pred_check
    _
  $region3: #{fam_forward.1} parent=0 // pred_check_branch
    %10 = sbr.rel (0) target = $region5
  $region4: #{fam_forward.1} parent=0 // pred_region
    _
  $region5: #{fam_forward.1} parent=0 // pred_fallthru
    _
  // Predicated region
  $region6: #{fam_forward.1} parent=0 // pred_check
    _
  $region7: #{fam_forward.1} parent=0 // pred_check_branch
    %12 = sbr.rel (0) target = $region9
  $region8: #{fam_forward.1} parent=0 // pred_region
    _
  $region9: #{fam_forward.1} parent=0 // pred_fallthru
    _
  // Predicated region
  $region10: #{fam_forward.1} parent=0 // pred_check
    _
  $region11: #{fam_forward.1} parent=0 // pred_check_branch
    %14 = sbr.rel (0) target = $region13
  $region12: #{fam_forward.1} parent=0 // pred_region
    _
  $region13: #{fam_forward.1} parent=0 // pred_fallthru
    _
  // Predicated region
  $region14: #{fam_forward.1} parent=0 // pred_check
    _
  $region15: #{fam_forward.1} parent=0 // pred_check_branch
    %16 = sbr.rel (0) target = $region17
  $region16: #{fam_forward.1} parent=0 // pred_region
    _
  $region17: #{fam_forward.1} parent=0 // pred_fallthru
    _
  %v17 = vld [vmem:[%s0] sm:$0xff]
  %v18 = vld [vmem:[%s0 + $0x8] sm:$0xff]
  %v19 = vld [vmem:[%s1] sm:$0xff]
  %v20 = vld [vmem:[%s1 + $0x8] sm:$0xff]
  %v21 = vmul.f32 %v17, %v19
  %v22 = vmul.f32 %v18, %v20
  %v23 = vlaneseq
  %v24 = vand.u32 %v23, 127
  %v25 = vadd.s32 %v24, 128
  %v26 = vcvt.s32.f32 %v24
  %v27 = vcvt.s32.f32 %v25
  %v28 = vrcp.pop 16.0
  %v29 = vmul.f32 %v26, %v28
  %v30 = vmul.f32 %v27, %v28
  %v31 = vfloor.f32 %v29
  %v32 = vfloor.f32 %v30
  %v33 = vmul.f32 %v31, 16.0
  %v34 = vmul.f32 %v32, 16.0
  %v35 = vsub.f32 %v26, %v33
  %v36 = vsub.f32 %v27, %v34
  %vm37 = vcmp.ge.f32.partialorder %v26, 16.0
  %vm38 = vcmp.ge.f32.partialorder %v27, 16.0
  %vm39 = vcmp.lt.f32.partialorder %v26, 240.0
  %vm40 = vcmp.lt.f32.partialorder %v27, 240.0
  %vm41 = vcmp.ge.f32.partialorder %v35, 1.0
  %vm42 = vcmp.ge.f32.partialorder %v36, 1.0
  %vm43 = vcmp.le.f32.partialorder %v35, 14.0
  %vm44 = vcmp.le.f32.partialorder %v36, 14.0
  %v45 = vld [vmem:[%s3] sm:$0xff]
  %46 = vrot.lane.b32.xlu0 %v21, 17
  %v47 = vpop.permute.xlu0 %46
  %48 = vrot.lane.b32.xlu0 %v22, 17
  %v49 = vpop.permute.xlu0 %48
  %vm50 = vcmp.lt.s32.totalorder %v24, 17
  %v51 = vsel %vm50, %v47, %v49
  %v52 = vsel %vm50, %v49, %v47
  %vm53 = vmand %vm37, %vm41
  %vm54 = vmand %vm38, %vm42
  %v55 = vsel %vm53, %v52, 0.0
  %v56 = vsel %vm54, %v51, 0.0
  %v57 = vld [vmem:[%s2] sm:$0xff]
  %vm58 = vcmask 64512
  %v60 = vsel %vm58, %v57, 0
  %62 = vmatprep.subr.mxu0 %v56
  %63 = vmatpush1.msra.mxu0 %v55
  %64 = vmatprep.subr.mxu0 0.0
  %65 = vmatpush1.msra.mxu0 0.0
  %66 = vmatprep.subr.mxu0 0.0
  %67 = vmatpush1.msra.mxu0 0.0
  %68 = vmatprep.subr.mxu0 0.0
  %69 = vmatpush1.msra.mxu0 0.0
  %70 = vmatprep.subr.mxu0 0.0
  %71 = vmatpush1.msra.mxu0 0.0
  %72 = vmatprep.subr.mxu0 0.0
  %73 = vmatpush1.msra.mxu0 0.0
  %74 = vmatprep.subr.mxu0 0.0
  %75 = vmatpush1.msra.mxu0 0.0
  %76 = vmatprep.subr.mxu0 0.0
  %77 = vmatpush1.msra.mxu0 0.0
  %78 = vmatprep.subr.mxu0 0.0
  %79 = vmatpush1.msra.mxu0 0.0
  %80 = vmatprep.subr.mxu0 0.0
  %81 = vmatpush1.msra.mxu0 0.0
  %82 = vmatprep.subr.mxu0 0.0
  %83 = vmatpush1.msra.mxu0 0.0
  %84 = vmatprep.subr.mxu0 0.0
  %85 = vmatpush1.msra.mxu0 0.0
  %86 = vmatprep.subr.mxu0 0.0
  %87 = vmatpush1.msra.mxu0 0.0
  %88 = vmatprep.subr.mxu0 0.0
  %89 = vmatpush1.msra.mxu0 0.0
  %90 = vmatprep.subr.mxu0 0.0
  %91 = vmatpush1.msra.mxu0 0.0
  %92 = vmatprep.subr.mxu0 0.0
  %93 = vmatpush1.msra.mxu0 0.0
  %94 = vmatprep.subr.mxu0 0.0
  %95 = vmatpush1.msra.mxu0 0.0
  %96 = vmatprep.subr.mxu0 0.0
  %97 = vmatpush1.msra.mxu0 0.0
  %98 = vmatprep.subr.mxu0 0.0
  %99 = vmatpush1.msra.mxu0 0.0
  %100 = vmatprep.subr.mxu0 0.0
  %101 = vmatpush1.msra.mxu0 0.0
  %102 = vmatprep.subr.mxu0 0.0
  %103 = vmatpush1.msra.mxu0 0.0
  %104 = vmatprep.subr.mxu0 0.0
  %105 = vmatpush1.msra.mxu0 0.0
  %106 = vmatprep.subr.mxu0 0.0
  %107 = vmatpush1.msra.mxu0 0.0
  %108 = vmatprep.subr.mxu0 0.0
  %109 = vmatpush1.msra.mxu0 0.0
  %110 = vmatprep.subr.mxu0 0.0
  %111 = vmatpush1.msra.mxu0 0.0
  %112 = vmatprep.subr.mxu0 0.0
  %113 = vmatpush1.msra.mxu0 0.0
  %114 = vmatprep.subr.mxu0 0.0
  %115 = vmatpush1.msra.mxu0 0.0
  %116 = vmatprep.subr.mxu0 0.0
  %117 = vmatpush1.msra.mxu0 0.0
  %118 = vmatprep.subr.mxu0 0.0
  %119 = vmatpush1.msra.mxu0 0.0
  %120 = vmatprep.subr.mxu0 0.0
  %121 = vmatpush1.msra.mxu0 0.0
  %122 = vmatprep.subr.mxu0 0.0
  %123 = vmatpush1.msra.mxu0 0.0
  %124 = vmatprep.subr.mxu0 0.0
  %125 = vmatpush1.msra.mxu0 0.0
  %126 = vmatprep.mubr.f32.mxu0 0.0
  %127 = vmatmul.mubr.f32.gmra.mrb[0].mxu0 %v60
  %v128 = vpop.f32.mrb[0].mxu0
  %v129 = vadd.f32 0.0, %v128
  %v130 = vpop.f32.mrb[0].mxu0
  %v131 = vadd.f32 0.0, %v130
  %132 = vdwg.mxu0
  %134 = vset.pattern.permute.xlu0 0
  %135 = vperm.xlu0 %134, %v45
  %v136 = vpop.permute.xlu0 %135
  %v138 = vadd.f32 %v136, %v129
  %v139 = vadd.f32 %v136, %v131
  %140 = vrot.lane.b32.xlu0 %v21, 16
  %v141 = vpop.permute.xlu0 %140
  %142 = vrot.lane.b32.xlu0 %v22, 16
  %v143 = vpop.permute.xlu0 %142
  %vm144 = vcmp.lt.s32.totalorder %v24, 16
  %v145 = vsel %vm144, %v141, %v143
  %v146 = vsel %vm144, %v143, %v141
  %v147 = vsel %vm37, %v146, 0.0
  %v148 = vsel %vm38, %v145, 0.0
  %v149 = vld [vmem:[%s2 + $0x8] sm:$0xff]
  %v151 = vsel %vm58, %v149, 0
  %153 = vmatprep.subr.mxu0 %v148
  %154 = vmatpush1.msra.mxu0 %v147
  %155 = vmatprep.subr.mxu0 0.0
  %156 = vmatpush1.msra.mxu0 0.0
  %157 = vmatprep.subr.mxu0 0.0
  %158 = vmatpush1.msra.mxu0 0.0
  %159 = vmatprep.subr.mxu0 0.0
  %160 = vmatpush1.msra.mxu0 0.0
  %161 = vmatprep.subr.mxu0 0.0
  %162 = vmatpush1.msra.mxu0 0.0
  %163 = vmatprep.subr.mxu0 0.0
  %164 = vmatpush1.msra.mxu0 0.0
  %165 = vmatprep.subr.mxu0 0.0
  %166 = vmatpush1.msra.mxu0 0.0
  %167 = vmatprep.subr.mxu0 0.0
  %168 = vmatpush1.msra.mxu0 0.0
  %169 = vmatprep.subr.mxu0 0.0
  %170 = vmatpush1.msra.mxu0 0.0
  %171 = vmatprep.subr.mxu0 0.0
  %172 = vmatpush1.msra.mxu0 0.0
  %173 = vmatprep.subr.mxu0 0.0
  %174 = vmatpush1.msra.mxu0 0.0
  %175 = vmatprep.subr.mxu0 0.0
  %176 = vmatpush1.msra.mxu0 0.0
  %177 = vmatprep.subr.mxu0 0.0
  %178 = vmatpush1.msra.mxu0 0.0
  %179 = vmatprep.subr.mxu0 0.0
  %180 = vmatpush1.msra.mxu0 0.0
  %181 = vmatprep.subr.mxu0 0.0
  %182 = vmatpush1.msra.mxu0 0.0
  %183 = vmatprep.subr.mxu0 0.0
  %184 = vmatpush1.msra.mxu0 0.0
  %185 = vmatprep.subr.mxu0 0.0
  %186 = vmatpush1.msra.mxu0 0.0
  %187 = vmatprep.subr.mxu0 0.0
  %188 = vmatpush1.msra.mxu0 0.0
  %189 = vmatprep.subr.mxu0 0.0
  %190 = vmatpush1.msra.mxu0 0.0
  %191 = vmatprep.subr.mxu0 0.0
  %192 = vmatpush1.msra.mxu0 0.0
  %193 = vmatprep.subr.mxu0 0.0
  %194 = vmatpush1.msra.mxu0 0.0
  %195 = vmatprep.subr.mxu0 0.0
  %196 = vmatpush1.msra.mxu0 0.0
  %197 = vmatprep.subr.mxu0 0.0
  %198 = vmatpush1.msra.mxu0 0.0
  %199 = vmatprep.subr.mxu0 0.0
  %200 = vmatpush1.msra.mxu0 0.0
  %201 = vmatprep.subr.mxu0 0.0
  %202 = vmatpush1.msra.mxu0 0.0
  %203 = vmatprep.subr.mxu0 0.0
  %204 = vmatpush1.msra.mxu0 0.0
  %205 = vmatprep.subr.mxu0 0.0
  %206 = vmatpush1.msra.mxu0 0.0
  %207 = vmatprep.subr.mxu0 0.0
  %208 = vmatpush1.msra.mxu0 0.0
  %209 = vmatprep.subr.mxu0 0.0
  %210 = vmatpush1.msra.mxu0 0.0
  %211 = vmatprep.subr.mxu0 0.0
  %212 = vmatpush1.msra.mxu0 0.0
  %213 = vmatprep.subr.mxu0 0.0
  %214 = vmatpush1.msra.mxu0 0.0
  %215 = vmatprep.subr.mxu0 0.0
  %216 = vmatpush1.msra.mxu0 0.0
  %217 = vmatprep.mubr.f32.mxu0 0.0
  %218 = vmatmul.mubr.f32.gmra.mrb[0].mxu0 %v151
  %v219 = vpop.f32.mrb[0].mxu0
  %v220 = vadd.f32 0.0, %v219
  %v221 = vpop.f32.mrb[0].mxu0
  %v222 = vadd.f32 0.0, %v221
  %223 = vdwg.mxu0
  %v224 = vadd.f32 %v138, %v220
  %v225 = vadd.f32 %v139, %v222
  %226 = vrot.lane.b32.xlu0 %v21, 15
  %v227 = vpop.permute.xlu0 %226
  %228 = vrot.lane.b32.xlu0 %v22, 15
  %v229 = vpop.permute.xlu0 %228
  %vm230 = vcmp.lt.s32.totalorder %v24, 15
  %v231 = vsel %vm230, %v227, %v229
  %v232 = vsel %vm230, %v229, %v227
  %vm233 = vmand %vm37, %vm43
  %vm234 = vmand %vm38, %vm44
  %v235 = vsel %vm233, %v232, 0.0
  %v236 = vsel %vm234, %v231, 0.0
  %v237 = vld [vmem:[%s2 + $0x10] sm:$0xff]
  %v239 = vsel %vm58, %v237, 0
  %241 = vmatprep.subr.mxu0 %v236
  %242 = vmatpush1.msra.mxu0 %v235
  %243 = vmatprep.subr.mxu0 0.0
  %244 = vmatpush1.msra.mxu0 0.0
  %245 = vmatprep.subr.mxu0 0.0
  %246 = vmatpush1.msra.mxu0 0.0
  %247 = vmatprep.subr.mxu0 0.0
  %248 = vmatpush1.msra.mxu0 0.0
  %249 = vmatprep.subr.mxu0 0.0
  %250 = vmatpush1.msra.mxu0 0.0
  %251 = vmatprep.subr.mxu0 0.0
  %252 = vmatpush1.msra.mxu0 0.0
  %253 = vmatprep.subr.mxu0 0.0
  %254 = vmatpush1.msra.mxu0 0.0
  %255 = vmatprep.subr.mxu0 0.0
  %256 = vmatpush1.msra.mxu0 0.0
  %257 = vmatprep.subr.mxu0 0.0
  %258 = vmatpush1.msra.mxu0 0.0
  %259 = vmatprep.subr.mxu0 0.0
  %260 = vmatpush1.msra.mxu0 0.0
  %261 = vmatprep.subr.mxu0 0.0
  %262 = vmatpush1.msra.mxu0 0.0
  %263 = vmatprep.subr.mxu0 0.0
  %264 = vmatpush1.msra.mxu0 0.0
  %265 = vmatprep.subr.mxu0 0.0
  %266 = vmatpush1.msra.mxu0 0.0
  %267 = vmatprep.subr.mxu0 0.0
  %268 = vmatpush1.msra.mxu0 0.0
  %269 = vmatprep.subr.mxu0 0.0
  %270 = vmatpush1.msra.mxu0 0.0
  %271 = vmatprep.subr.mxu0 0.0
  %272 = vmatpush1.msra.mxu0 0.0
  %273 = vmatprep.subr.mxu0 0.0
  %274 = vmatpush1.msra.mxu0 0.0
  %275 = vmatprep.subr.mxu0 0.0
  %276 = vmatpush1.msra.mxu0 0.0
  %277 = vmatprep.subr.mxu0 0.0
  %278 = vmatpush1.msra.mxu0 0.0
  %279 = vmatprep.subr.mxu0 0.0
  %280 = vmatpush1.msra.mxu0 0.0
  %281 = vmatprep.subr.mxu0 0.0
  %282 = vmatpush1.msra.mxu0 0.0
  %283 = vmatprep.subr.mxu0 0.0
  %284 = vmatpush1.msra.mxu0 0.0
  %285 = vmatprep.subr.mxu0 0.0
  %286 = vmatpush1.msra.mxu0 0.0
  %287 = vmatprep.subr.mxu0 0.0
  %288 = vmatpush1.msra.mxu0 0.0
  %289 = vmatprep.subr.mxu0 0.0
  %290 = vmatpush1.msra.mxu0 0.0
  %291 = vmatprep.subr.mxu0 0.0
  %292 = vmatpush1.msra.mxu0 0.0
  %293 = vmatprep.subr.mxu0 0.0
  %294 = vmatpush1.msra.mxu0 0.0
  %295 = vmatprep.subr.mxu0 0.0
  %296 = vmatpush1.msra.mxu0 0.0
  %297 = vmatprep.subr.mxu0 0.0
  %298 = vmatpush1.msra.mxu0 0.0
  %299 = vmatprep.subr.mxu0 0.0
  %300 = vmatpush1.msra.mxu0 0.0
  %301 = vmatprep.subr.mxu0 0.0
  %302 = vmatpush1.msra.mxu0 0.0
  %303 = vmatprep.subr.mxu0 0.0
  %304 = vmatpush1.msra.mxu0 0.0
  %305 = vmatprep.mubr.f32.mxu0 0.0
  %306 = vmatmul.mubr.f32.gmra.mrb[0].mxu0 %v239
  %v307 = vpop.f32.mrb[0].mxu0
  %v308 = vadd.f32 0.0, %v307
  %v309 = vpop.f32.mrb[0].mxu0
  %v310 = vadd.f32 0.0, %v309
  %311 = vdwg.mxu0
  %v312 = vadd.f32 %v224, %v308
  %v313 = vadd.f32 %v225, %v310
  %314 = vrot.lane.b32.xlu0 %v21, 1
  %v315 = vpop.permute.xlu0 %314
  %316 = vrot.lane.b32.xlu0 %v22, 1
  %v317 = vpop.permute.xlu0 %316
  %vm318 = vcmp.lt.s32.totalorder %v24, 1
  %v319 = vsel %vm318, %v315, %v317
  %v320 = vsel %vm318, %v317, %v315
  %v321 = vsel %vm41, %v320, 0.0
  %v322 = vsel %vm42, %v319, 0.0
  %v323 = vld [vmem:[%s2 + $0x18] sm:$0xff]
  %v325 = vsel %vm58, %v323, 0
  %327 = vmatprep.subr.mxu0 %v322
  %328 = vmatpush1.msra.mxu0 %v321
  %329 = vmatprep.subr.mxu0 0.0
  %330 = vmatpush1.msra.mxu0 0.0
  %331 = vmatprep.subr.mxu0 0.0
  %332 = vmatpush1.msra.mxu0 0.0
  %333 = vmatprep.subr.mxu0 0.0
  %334 = vmatpush1.msra.mxu0 0.0
  %335 = vmatprep.subr.mxu0 0.0
  %336 = vmatpush1.msra.mxu0 0.0
  %337 = vmatprep.subr.mxu0 0.0
  %338 = vmatpush1.msra.mxu0 0.0
  %339 = vmatprep.subr.mxu0 0.0
  %340 = vmatpush1.msra.mxu0 0.0
  %341 = vmatprep.subr.mxu0 0.0
  %342 = vmatpush1.msra.mxu0 0.0
  %343 = vmatprep.subr.mxu0 0.0
  %344 = vmatpush1.msra.mxu0 0.0
  %345 = vmatprep.subr.mxu0 0.0
  %346 = vmatpush1.msra.mxu0 0.0
  %347 = vmatprep.subr.mxu0 0.0
  %348 = vmatpush1.msra.mxu0 0.0
  %349 = vmatprep.subr.mxu0 0.0
  %350 = vmatpush1.msra.mxu0 0.0
  %351 = vmatprep.subr.mxu0 0.0
  %352 = vmatpush1.msra.mxu0 0.0
  %353 = vmatprep.subr.mxu0 0.0
  %354 = vmatpush1.msra.mxu0 0.0
  %355 = vmatprep.subr.mxu0 0.0
  %356 = vmatpush1.msra.mxu0 0.0
  %357 = vmatprep.subr.mxu0 0.0
  %358 = vmatpush1.msra.mxu0 0.0
  %359 = vmatprep.subr.mxu0 0.0
  %360 = vmatpush1.msra.mxu0 0.0
  %361 = vmatprep.subr.mxu0 0.0
  %362 = vmatpush1.msra.mxu0 0.0
  %363 = vmatprep.subr.mxu0 0.0
  %364 = vmatpush1.msra.mxu0 0.0
  %365 = vmatprep.subr.mxu0 0.0
  %366 = vmatpush1.msra.mxu0 0.0
  %367 = vmatprep.subr.mxu0 0.0
  %368 = vmatpush1.msra.mxu0 0.0
  %369 = vmatprep.subr.mxu0 0.0
  %370 = vmatpush1.msra.mxu0 0.0
  %371 = vmatprep.subr.mxu0 0.0
  %372 = vmatpush1.msra.mxu0 0.0
  %373 = vmatprep.subr.mxu0 0.0
  %374 = vmatpush1.msra.mxu0 0.0
  %375 = vmatprep.subr.mxu0 0.0
  %376 = vmatpush1.msra.mxu0 0.0
  %377 = vmatprep.subr.mxu0 0.0
  %378 = vmatpush1.msra.mxu0 0.0
  %379 = vmatprep.subr.mxu0 0.0
  %380 = vmatpush1.msra.mxu0 0.0
  %381 = vmatprep.subr.mxu0 0.0
  %382 = vmatpush1.msra.mxu0 0.0
  %383 = vmatprep.subr.mxu0 0.0
  %384 = vmatpush1.msra.mxu0 0.0
  %385 = vmatprep.subr.mxu0 0.0
  %386 = vmatpush1.msra.mxu0 0.0
  %387 = vmatprep.subr.mxu0 0.0
  %388 = vmatpush1.msra.mxu0 0.0
  %389 = vmatprep.subr.mxu0 0.0
  %390 = vmatpush1.msra.mxu0 0.0
  %391 = vmatprep.mubr.f32.mxu0 0.0
  %392 = vmatmul.mubr.f32.gmra.mrb[0].mxu0 %v325
  %v393 = vpop.f32.mrb[0].mxu0
  %v394 = vadd.f32 0.0, %v393
  %v395 = vpop.f32.mrb[0].mxu0
  %v396 = vadd.f32 0.0, %v395
  %397 = vdwg.mxu0
  %v398 = vadd.f32 %v312, %v394
  %v399 = vadd.f32 %v313, %v396
  %v400 = vld [vmem:[%s2 + $0x20] sm:$0xff]
  %v402 = vsel %vm58, %v400, 0
  %404 = vmatprep.subr.mxu0 %v22
  %405 = vmatpush1.msra.mxu0 %v21
  %406 = vmatprep.subr.mxu0 0.0
  %407 = vmatpush1.msra.mxu0 0.0
  %408 = vmatprep.subr.mxu0 0.0
  %409 = vmatpush1.msra.mxu0 0.0
  %410 = vmatprep.subr.mxu0 0.0
  %411 = vmatpush1.msra.mxu0 0.0
  %412 = vmatprep.subr.mxu0 0.0
  %413 = vmatpush1.msra.mxu0 0.0
  %414 = vmatprep.subr.mxu0 0.0
  %415 = vmatpush1.msra.mxu0 0.0
  %416 = vmatprep.subr.mxu0 0.0
  %417 = vmatpush1.msra.mxu0 0.0
  %418 = vmatprep.subr.mxu0 0.0
  %419 = vmatpush1.msra.mxu0 0.0
  %420 = vmatprep.subr.mxu0 0.0
  %421 = vmatpush1.msra.mxu0 0.0
  %422 = vmatprep.subr.mxu0 0.0
  %423 = vmatpush1.msra.mxu0 0.0
  %424 = vmatprep.subr.mxu0 0.0
  %425 = vmatpush1.msra.mxu0 0.0
  %426 = vmatprep.subr.mxu0 0.0
  %427 = vmatpush1.msra.mxu0 0.0
  %428 = vmatprep.subr.mxu0 0.0
  %429 = vmatpush1.msra.mxu0 0.0
  %430 = vmatprep.subr.mxu0 0.0
  %431 = vmatpush1.msra.mxu0 0.0
  %432 = vmatprep.subr.mxu0 0.0
  %433 = vmatpush1.msra.mxu0 0.0
  %434 = vmatprep.subr.mxu0 0.0
  %435 = vmatpush1.msra.mxu0 0.0
  %436 = vmatprep.subr.mxu0 0.0
  %437 = vmatpush1.msra.mxu0 0.0
  %438 = vmatprep.subr.mxu0 0.0
  %439 = vmatpush1.msra.mxu0 0.0
  %440 = vmatprep.subr.mxu0 0.0
  %441 = vmatpush1.msra.mxu0 0.0
  %442 = vmatprep.subr.mxu0 0.0
  %443 = vmatpush1.msra.mxu0 0.0
  %444 = vmatprep.subr.mxu0 0.0
  %445 = vmatpush1.msra.mxu0 0.0
  %446 = vmatprep.subr.mxu0 0.0
  %447 = vmatpush1.msra.mxu0 0.0
  %448 = vmatprep.subr.mxu0 0.0
  %449 = vmatpush1.msra.mxu0 0.0
  %450 = vmatprep.subr.mxu0 0.0
  %451 = vmatpush1.msra.mxu0 0.0
  %452 = vmatprep.subr.mxu0 0.0
  %453 = vmatpush1.msra.mxu0 0.0
  %454 = vmatprep.subr.mxu0 0.0
  %455 = vmatpush1.msra.mxu0 0.0
  %456 = vmatprep.subr.mxu0 0.0
  %457 = vmatpush1.msra.mxu0 0.0
  %458 = vmatprep.subr.mxu0 0.0
  %459 = vmatpush1.msra.mxu0 0.0
  %460 = vmatprep.subr.mxu0 0.0
  %461 = vmatpush1.msra.mxu0 0.0
  %462 = vmatprep.subr.mxu0 0.0
  %463 = vmatpush1.msra.mxu0 0.0
  %464 = vmatprep.subr.mxu0 0.0
  %465 = vmatpush1.msra.mxu0 0.0
  %466 = vmatprep.subr.mxu0 0.0
  %467 = vmatpush1.msra.mxu0 0.0
  %468 = vmatprep.mubr.f32.mxu0 0.0
  %469 = vmatmul.mubr.f32.gmra.mrb[0].mxu0 %v402
  %v470 = vpop.f32.mrb[0].mxu0
  %v471 = vadd.f32 0.0, %v470
  %v472 = vpop.f32.mrb[0].mxu0
  %v473 = vadd.f32 0.0, %v472
  %474 = vdwg.mxu0
  %v475 = vadd.f32 %v398, %v471
  %v476 = vadd.f32 %v399, %v473
  %477 = vrot.lane.b32.xlu0 %v21, 127
  %v478 = vpop.permute.xlu0 %477
  %479 = vrot.lane.b32.xlu0 %v22, 127
  %v480 = vpop.permute.xlu0 %479
  %vm481 = vcmp.lt.s32.totalorder %v24, 127
  %v482 = vsel %vm481, %v478, %v480
  %v483 = vsel %vm481, %v480, %v478
  %v484 = vsel %vm43, %v482, 0.0
  %v485 = vsel %vm44, %v483, 0.0
  %v486 = vld [vmem:[%s2 + $0x28] sm:$0xff]
  %v488 = vsel %vm58, %v486, 0
  %490 = vmatprep.subr.mxu0 %v485
  %491 = vmatpush1.msra.mxu0 %v484
  %492 = vmatprep.subr.mxu0 0.0
  %493 = vmatpush1.msra.mxu0 0.0
  %494 = vmatprep.subr.mxu0 0.0
  %495 = vmatpush1.msra.mxu0 0.0
  %496 = vmatprep.subr.mxu0 0.0
  %497 = vmatpush1.msra.mxu0 0.0
  %498 = vmatprep.subr.mxu0 0.0
  %499 = vmatpush1.msra.mxu0 0.0
  %500 = vmatprep.subr.mxu0 0.0
  %501 = vmatpush1.msra.mxu0 0.0
  %502 = vmatprep.subr.mxu0 0.0
  %503 = vmatpush1.msra.mxu0 0.0
  %504 = vmatprep.subr.mxu0 0.0
  %505 = vmatpush1.msra.mxu0 0.0
  %506 = vmatprep.subr.mxu0 0.0
  %507 = vmatpush1.msra.mxu0 0.0
  %508 = vmatprep.subr.mxu0 0.0
  %509 = vmatpush1.msra.mxu0 0.0
  %510 = vmatprep.subr.mxu0 0.0
  %511 = vmatpush1.msra.mxu0 0.0
  %512 = vmatprep.subr.mxu0 0.0
  %513 = vmatpush1.msra.mxu0 0.0
  %514 = vmatprep.subr.mxu0 0.0
  %515 = vmatpush1.msra.mxu0 0.0
  %516 = vmatprep.subr.mxu0 0.0
  %517 = vmatpush1.msra.mxu0 0.0
  %518 = vmatprep.subr.mxu0 0.0
  %519 = vmatpush1.msra.mxu0 0.0
  %520 = vmatprep.subr.mxu0 0.0
  %521 = vmatpush1.msra.mxu0 0.0
  %522 = vmatprep.subr.mxu0 0.0
  %523 = vmatpush1.msra.mxu0 0.0
  %524 = vmatprep.subr.mxu0 0.0
  %525 = vmatpush1.msra.mxu0 0.0
  %526 = vmatprep.subr.mxu0 0.0
  %527 = vmatpush1.msra.mxu0 0.0
  %528 = vmatprep.subr.mxu0 0.0
  %529 = vmatpush1.msra.mxu0 0.0
  %530 = vmatprep.subr.mxu0 0.0
  %531 = vmatpush1.msra.mxu0 0.0
  %532 = vmatprep.subr.mxu0 0.0
  %533 = vmatpush1.msra.mxu0 0.0
  %534 = vmatprep.subr.mxu0 0.0
  %535 = vmatpush1.msra.mxu0 0.0
  %536 = vmatprep.subr.mxu0 0.0
  %537 = vmatpush1.msra.mxu0 0.0
  %538 = vmatprep.subr.mxu0 0.0
  %539 = vmatpush1.msra.mxu0 0.0
  %540 = vmatprep.subr.mxu0 0.0
  %541 = vmatpush1.msra.mxu0 0.0
  %542 = vmatprep.subr.mxu0 0.0
  %543 = vmatpush1.msra.mxu0 0.0
  %544 = vmatprep.subr.mxu0 0.0
  %545 = vmatpush1.msra.mxu0 0.0
  %546 = vmatprep.subr.mxu0 0.0
  %547 = vmatpush1.msra.mxu0 0.0
  %548 = vmatprep.subr.mxu0 0.0
  %549 = vmatpush1.msra.mxu0 0.0
  %550 = vmatprep.subr.mxu0 0.0
  %551 = vmatpush1.msra.mxu0 0.0
  %552 = vmatprep.subr.mxu0 0.0
  %553 = vmatpush1.msra.mxu0 0.0
  %554 = vmatprep.mubr.f32.mxu0 0.0
  %555 = vmatmul.mubr.f32.gmra.mrb[0].mxu0 %v488
  %v556 = vpop.f32.mrb[0].mxu0
  %v557 = vadd.f32 0.0, %v556
  %v558 = vpop.f32.mrb[0].mxu0
  %v559 = vadd.f32 0.0, %v558
  %560 = vdwg.mxu0
  %v561 = vadd.f32 %v475, %v557
  %v562 = vadd.f32 %v476, %v559
  %563 = vrot.lane.b32.xlu0 %v21, 113
  %v564 = vpop.permute.xlu0 %563
  %565 = vrot.lane.b32.xlu0 %v22, 113
  %v566 = vpop.permute.xlu0 %565
  %vm567 = vcmp.lt.s32.totalorder %v24, 113
  %v568 = vsel %vm567, %v564, %v566
  %v569 = vsel %vm567, %v566, %v564
  %vm570 = vmand %vm39, %vm41
  %vm571 = vmand %vm40, %vm42
  %v572 = vsel %vm570, %v568, 0.0
  %v573 = vsel %vm571, %v569, 0.0
  %v574 = vld [vmem:[%s2 + $0x30] sm:$0xff]
  %v576 = vsel %vm58, %v574, 0
  %578 = vmatprep.subr.mxu0 %v573
  %579 = vmatpush1.msra.mxu0 %v572
  %580 = vmatprep.subr.mxu0 0.0
  %581 = vmatpush1.msra.mxu0 0.0
  %582 = vmatprep.subr.mxu0 0.0
  %583 = vmatpush1.msra.mxu0 0.0
  %584 = vmatprep.subr.mxu0 0.0
  %585 = vmatpush1.msra.mxu0 0.0
  %586 = vmatprep.subr.mxu0 0.0
  %587 = vmatpush1.msra.mxu0 0.0
  %588 = vmatprep.subr.mxu0 0.0
  %589 = vmatpush1.msra.mxu0 0.0
  %590 = vmatprep.subr.mxu0 0.0
  %591 = vmatpush1.msra.mxu0 0.0
  %592 = vmatprep.subr.mxu0 0.0
  %593 = vmatpush1.msra.mxu0 0.0
  %594 = vmatprep.subr.mxu0 0.0
  %595 = vmatpush1.msra.mxu0 0.0
  %596 = vmatprep.subr.mxu0 0.0
  %597 = vmatpush1.msra.mxu0 0.0
  %598 = vmatprep.subr.mxu0 0.0
  %599 = vmatpush1.msra.mxu0 0.0
  %600 = vmatprep.subr.mxu0 0.0
  %601 = vmatpush1.msra.mxu0 0.0
  %602 = vmatprep.subr.mxu0 0.0
  %603 = vmatpush1.msra.mxu0 0.0
  %604 = vmatprep.subr.mxu0 0.0
  %605 = vmatpush1.msra.mxu0 0.0
  %606 = vmatprep.subr.mxu0 0.0
  %607 = vmatpush1.msra.mxu0 0.0
  %608 = vmatprep.subr.mxu0 0.0
  %609 = vmatpush1.msra.mxu0 0.0
  %610 = vmatprep.subr.mxu0 0.0
  %611 = vmatpush1.msra.mxu0 0.0
  %612 = vmatprep.subr.mxu0 0.0
  %613 = vmatpush1.msra.mxu0 0.0
  %614 = vmatprep.subr.mxu0 0.0
  %615 = vmatpush1.msra.mxu0 0.0
  %616 = vmatprep.subr.mxu0 0.0
  %617 = vmatpush1.msra.mxu0 0.0
  %618 = vmatprep.subr.mxu0 0.0
  %619 = vmatpush1.msra.mxu0 0.0
  %620 = vmatprep.subr.mxu0 0.0
  %621 = vmatpush1.msra.mxu0 0.0
  %622 = vmatprep.subr.mxu0 0.0
  %623 = vmatpush1.msra.mxu0 0.0
  %624 = vmatprep.subr.mxu0 0.0
  %625 = vmatpush1.msra.mxu0 0.0
  %626 = vmatprep.subr.mxu0 0.0
  %627 = vmatpush1.msra.mxu0 0.0
  %628 = vmatprep.subr.mxu0 0.0
  %629 = vmatpush1.msra.mxu0 0.0
  %630 = vmatprep.subr.mxu0 0.0
  %631 = vmatpush1.msra.mxu0 0.0
  %632 = vmatprep.subr.mxu0 0.0
  %633 = vmatpush1.msra.mxu0 0.0
  %634 = vmatprep.subr.mxu0 0.0
  %635 = vmatpush1.msra.mxu0 0.0
  %636 = vmatprep.subr.mxu0 0.0
  %637 = vmatpush1.msra.mxu0 0.0
  %638 = vmatprep.subr.mxu0 0.0
  %639 = vmatpush1.msra.mxu0 0.0
  %640 = vmatprep.subr.mxu0 0.0
  %641 = vmatpush1.msra.mxu0 0.0
  %642 = vmatprep.mubr.f32.mxu0 0.0
  %643 = vmatmul.mubr.f32.gmra.mrb[0].mxu0 %v576
  %v644 = vpop.f32.mrb[0].mxu0
  %v645 = vadd.f32 0.0, %v644
  %v646 = vpop.f32.mrb[0].mxu0
  %v647 = vadd.f32 0.0, %v646
  %648 = vdwg.mxu0
  %v649 = vadd.f32 %v561, %v645
  %v650 = vadd.f32 %v562, %v647
  %651 = vrot.lane.b32.xlu0 %v21, 112
  %v652 = vpop.permute.xlu0 %651
  %653 = vrot.lane.b32.xlu0 %v22, 112
  %v654 = vpop.permute.xlu0 %653
  %vm655 = vcmp.lt.s32.totalorder %v24, 112
  %v656 = vsel %vm655, %v652, %v654
  %v657 = vsel %vm655, %v654, %v652
  %v658 = vsel %vm39, %v656, 0.0
  %v659 = vsel %vm40, %v657, 0.0
  %v660 = vld [vmem:[%s2 + $0x38] sm:$0xff]
  %v662 = vsel %vm58, %v660, 0
  %664 = vmatprep.subr.mxu0 %v659
  %665 = vmatpush1.msra.mxu0 %v658
  %666 = vmatprep.subr.mxu0 0.0
  %667 = vmatpush1.msra.mxu0 0.0
  %668 = vmatprep.subr.mxu0 0.0
  %669 = vmatpush1.msra.mxu0 0.0
  %670 = vmatprep.subr.mxu0 0.0
  %671 = vmatpush1.msra.mxu0 0.0
  %672 = vmatprep.subr.mxu0 0.0
  %673 = vmatpush1.msra.mxu0 0.0
  %674 = vmatprep.subr.mxu0 0.0
  %675 = vmatpush1.msra.mxu0 0.0
  %676 = vmatprep.subr.mxu0 0.0
  %677 = vmatpush1.msra.mxu0 0.0
  %678 = vmatprep.subr.mxu0 0.0
  %679 = vmatpush1.msra.mxu0 0.0
  %680 = vmatprep.subr.mxu0 0.0
  %681 = vmatpush1.msra.mxu0 0.0
  %682 = vmatprep.subr.mxu0 0.0
  %683 = vmatpush1.msra.mxu0 0.0
  %684 = vmatprep.subr.mxu0 0.0
  %685 = vmatpush1.msra.mxu0 0.0
  %686 = vmatprep.subr.mxu0 0.0
  %687 = vmatpush1.msra.mxu0 0.0
  %688 = vmatprep.subr.mxu0 0.0
  %689 = vmatpush1.msra.mxu0 0.0
  %690 = vmatprep.subr.mxu0 0.0
  %691 = vmatpush1.msra.mxu0 0.0
  %692 = vmatprep.subr.mxu0 0.0
  %693 = vmatpush1.msra.mxu0 0.0
  %694 = vmatprep.subr.mxu0 0.0
  %695 = vmatpush1.msra.mxu0 0.0
  %696 = vmatprep.subr.mxu0 0.0
  %697 = vmatpush1.msra.mxu0 0.0
  %698 = vmatprep.subr.mxu0 0.0
  %699 = vmatpush1.msra.mxu0 0.0
  %700 = vmatprep.subr.mxu0 0.0
  %701 = vmatpush1.msra.mxu0 0.0
  %702 = vmatprep.subr.mxu0 0.0
  %703 = vmatpush1.msra.mxu0 0.0
  %704 = vmatprep.subr.mxu0 0.0
  %705 = vmatpush1.msra.mxu0 0.0
  %706 = vmatprep.subr.mxu0 0.0
  %707 = vmatpush1.msra.mxu0 0.0
  %708 = vmatprep.subr.mxu0 0.0
  %709 = vmatpush1.msra.mxu0 0.0
  %710 = vmatprep.subr.mxu0 0.0
  %711 = vmatpush1.msra.mxu0 0.0
  %712 = vmatprep.subr.mxu0 0.0
  %713 = vmatpush1.msra.mxu0 0.0
  %714 = vmatprep.subr.mxu0 0.0
  %715 = vmatpush1.msra.mxu0 0.0
  %716 = vmatprep.subr.mxu0 0.0
  %717 = vmatpush1.msra.mxu0 0.0
  %718 = vmatprep.subr.mxu0 0.0
  %719 = vmatpush1.msra.mxu0 0.0
  %720 = vmatprep.subr.mxu0 0.0
  %721 = vmatpush1.msra.mxu0 0.0
  %722 = vmatprep.subr.mxu0 0.0
  %723 = vmatpush1.msra.mxu0 0.0
  %724 = vmatprep.subr.mxu0 0.0
  %725 = vmatpush1.msra.mxu0 0.0
  %726 = vmatprep.subr.mxu0 0.0
  %727 = vmatpush1.msra.mxu0 0.0
  %728 = vmatprep.mubr.f32.mxu0 0.0
  %729 = vmatmul.mubr.f32.gmra.mrb[0].mxu0 %v662
  %v730 = vpop.f32.mrb[0].mxu0
  %v731 = vadd.f32 0.0, %v730
  %v732 = vpop.f32.mrb[0].mxu0
  %v733 = vadd.f32 0.0, %v732
  %734 = vdwg.mxu0
  %v735 = vadd.f32 %v649, %v731
  %v736 = vadd.f32 %v650, %v733
  %737 = vrot.lane.b32.xlu0 %v21, 111
  %v738 = vpop.permute.xlu0 %737
  %739 = vrot.lane.b32.xlu0 %v22, 111
  %v740 = vpop.permute.xlu0 %739
  %vm741 = vcmp.lt.s32.totalorder %v24, 111
  %v742 = vsel %vm741, %v738, %v740
  %v743 = vsel %vm741, %v740, %v738
  %vm744 = vmand %vm39, %vm43
  %vm745 = vmand %vm40, %vm44
  %v746 = vsel %vm744, %v742, 0.0
  %v747 = vsel %vm745, %v743, 0.0
  %v748 = vld [vmem:[%s2 + $0x40] sm:$0xff]
  %v750 = vsel %vm58, %v748, 0
  %752 = vmatprep.subr.mxu0 %v747
  %753 = vmatpush1.msra.mxu0 %v746
  %754 = vmatprep.subr.mxu0 0.0
  %755 = vmatpush1.msra.mxu0 0.0
  %756 = vmatprep.subr.mxu0 0.0
  %757 = vmatpush1.msra.mxu0 0.0
  %758 = vmatprep.subr.mxu0 0.0
  %759 = vmatpush1.msra.mxu0 0.0
  %760 = vmatprep.subr.mxu0 0.0
  %761 = vmatpush1.msra.mxu0 0.0
  %762 = vmatprep.subr.mxu0 0.0
  %763 = vmatpush1.msra.mxu0 0.0
  %764 = vmatprep.subr.mxu0 0.0
  %765 = vmatpush1.msra.mxu0 0.0
  %766 = vmatprep.subr.mxu0 0.0
  %767 = vmatpush1.msra.mxu0 0.0
  %768 = vmatprep.subr.mxu0 0.0
  %769 = vmatpush1.msra.mxu0 0.0
  %770 = vmatprep.subr.mxu0 0.0
  %771 = vmatpush1.msra.mxu0 0.0
  %772 = vmatprep.subr.mxu0 0.0
  %773 = vmatpush1.msra.mxu0 0.0
  %774 = vmatprep.subr.mxu0 0.0
  %775 = vmatpush1.msra.mxu0 0.0
  %776 = vmatprep.subr.mxu0 0.0
  %777 = vmatpush1.msra.mxu0 0.0
  %778 = vmatprep.subr.mxu0 0.0
  %779 = vmatpush1.msra.mxu0 0.0
  %780 = vmatprep.subr.mxu0 0.0
  %781 = vmatpush1.msra.mxu0 0.0
  %782 = vmatprep.subr.mxu0 0.0
  %783 = vmatpush1.msra.mxu0 0.0
  %784 = vmatprep.subr.mxu0 0.0
  %785 = vmatpush1.msra.mxu0 0.0
  %786 = vmatprep.subr.mxu0 0.0
  %787 = vmatpush1.msra.mxu0 0.0
  %788 = vmatprep.subr.mxu0 0.0
  %789 = vmatpush1.msra.mxu0 0.0
  %790 = vmatprep.subr.mxu0 0.0
  %791 = vmatpush1.msra.mxu0 0.0
  %792 = vmatprep.subr.mxu0 0.0
  %793 = vmatpush1.msra.mxu0 0.0
  %794 = vmatprep.subr.mxu0 0.0
  %795 = vmatpush1.msra.mxu0 0.0
  %796 = vmatprep.subr.mxu0 0.0
  %797 = vmatpush1.msra.mxu0 0.0
  %798 = vmatprep.subr.mxu0 0.0
  %799 = vmatpush1.msra.mxu0 0.0
  %800 = vmatprep.subr.mxu0 0.0
  %801 = vmatpush1.msra.mxu0 0.0
  %802 = vmatprep.subr.mxu0 0.0
  %803 = vmatpush1.msra.mxu0 0.0
  %804 = vmatprep.subr.mxu0 0.0
  %805 = vmatpush1.msra.mxu0 0.0
  %806 = vmatprep.subr.mxu0 0.0
  %807 = vmatpush1.msra.mxu0 0.0
  %808 = vmatprep.subr.mxu0 0.0
  %809 = vmatpush1.msra.mxu0 0.0
  %810 = vmatprep.subr.mxu0 0.0
  %811 = vmatpush1.msra.mxu0 0.0
  %812 = vmatprep.subr.mxu0 0.0
  %813 = vmatpush1.msra.mxu0 0.0
  %814 = vmatprep.subr.mxu0 0.0
  %815 = vmatpush1.msra.mxu0 0.0
  %816 = vmatprep.mubr.f32.mxu0 0.0
  %817 = vmatmul.mubr.f32.gmra.mrb[0].mxu0 %v750
  %v818 = vpop.f32.mrb[0].mxu0
  %v819 = vadd.f32 0.0, %v818
  %v820 = vpop.f32.mrb[0].mxu0
  %v821 = vadd.f32 0.0, %v820
  %822 = vdwg.mxu0
  %v823 = vadd.f32 %v735, %v819
  %v824 = vadd.f32 %v736, %v821
  %vm825 = vcmp.gt.f32.partialorder %v823, 0.0
  %vm826 = vcmp.gt.f32.partialorder %v824, 0.0
  %v827 = vmin.f32 %v823, 0.0
  %v828 = vmin.f32 %v824, 0.0
  %v829 = vmul.f32 %v827, 1.442695
  %v830 = vpow.pop %v829
  %v831 = vmul.f32 %v828, 1.442695
  %v832 = vpow.pop %v831
  %v833 = vsub.f32 %v830, 1.0
  %v834 = vsub.f32 %v832, 1.0
  %v835 = vsel %vm825, %v823, %v833
  %v836 = vsel %vm826, %v824, %v834
  %v837 = vadd.f32 %v17, %v835
  %v838 = vadd.f32 %v18, %v836
  %839 = vst [vmem:[%s4] sm:$0xff] %v837
  %840 = vst [vmem:[%s4 + $0x8] sm:$0xff] %v838
  // Predicated region
  $region18: #{fam_forward.1} parent=0 // pred_check
    _
  $region19: #{fam_forward.1} parent=0 // pred_check_branch
    %842 = sbr.rel (0) target = $region21
  $region20: #{fam_forward.1} parent=0 // pred_region
    _
  $region21: #{fam_forward.1} parent=0 // pred_fallthru
    _
  // Predicated region
  $region22: #{fam_forward.1} parent=0 // pred_check
    _
  $region23: #{fam_forward.1} parent=0 // pred_check_branch
    %844 = sbr.rel (0) target = $region25
  $region24: #{fam_forward.1} parent=0 // pred_region
    _
  $region25: #{fam_forward.1} parent=0 // pred_fallthru
    _

</llo_original>
